<compile_context>
chip_gen: v7x
topology: tpu7x:2x2x1
jax: 0.10.0
libtpu: 0.0.40
codegen_flags: <defaults>
</compile_context>

<pallas_src>
import jax
import jax.numpy as jnp
from jax.experimental import pallas as pl
from jax.experimental.pallas import tpu as pltpu


def _h_swish_kernel(x_ref, o_ref):
    x = x_ref[...]
    # h_sigmoid(x) = relu6(x + 3) / 6  ;  h_swish(x) = x * h_sigmoid(x)
    hs = jnp.clip(x + 3.0, 0.0, 6.0) * (1.0 / 6.0)
    o_ref[...] = (x * hs).astype(o_ref.dtype)


def _sublane_multiple(dtype) -> int:
    itemsize = jnp.dtype(dtype).itemsize
    if itemsize >= 4:
        return 8
    if itemsize == 2:
        return 16
    return 32


def _run_2d(x2d: jax.Array, *, target_block_bytes: int = 2 * 1024 * 1024) -> jax.Array:
    """Run the elementwise kernel on a (rows, lanes) slab.

    rows must be a multiple of the dtype's sublane tile; lanes a multiple of 128.
    """
    rows, lanes = x2d.shape
    dtype = x2d.dtype
    itemsize = jnp.dtype(dtype).itemsize
    s = _sublane_multiple(dtype)

    # Largest ~target-sized block (in rows), rounded to the sublane multiple.
    tr = max(s, (target_block_bytes // (lanes * itemsize)) // s * s)
    tr = min(tr, rows)

    grid_n = pl.cdiv(rows, tr)
    # v7x: prefer >= 2 grid steps so both TensorCores get work (no-op on v5e/v6e).
    if grid_n == 1 and rows >= 2 * s:
        tr = (((rows + 1) // 2) + s - 1) // s * s
        grid_n = pl.cdiv(rows, tr)

    n = rows * lanes
    cost = pl.CostEstimate(
        flops=4 * n, transcendentals=0, bytes_accessed=2 * n * itemsize
    )

    return pl.pallas_call(
        _h_swish_kernel,
        out_shape=jax.ShapeDtypeStruct((rows, lanes), dtype),
        grid_spec=pltpu.PrefetchScalarGridSpec(
            num_scalar_prefetch=0,
            grid=(grid_n,),
            in_specs=[pl.BlockSpec((tr, lanes), lambda i: (i, 0))],
            out_specs=pl.BlockSpec((tr, lanes), lambda i: (i, 0)),
        ),
        compiler_params=pltpu.CompilerParams(
            dimension_semantics=("parallel",),
        ),
        cost_estimate=cost,
    )(x2d)


def h_swish(x: jax.Array) -> jax.Array:
    """Elementwise h_swish on an arbitrary-shaped array (e.g. NCHW)."""
    orig_shape = x.shape
    n = x.size
    if n == 0:
        return x
    s = _sublane_multiple(x.dtype)

    # Fast path: flat size already aligned to a (sublane, lanes) tile — pure
    # reshape of the contiguous buffer, no pad / no slice. Prefer the widest
    # lane-dense slab that divides n evenly.
    for lanes in (1024, 512, 256, 128):
        if n % (lanes * s) == 0:
            out2d = _run_2d(x.reshape(n // lanes, lanes))
            return out2d.reshape(orig_shape)

    # Fallback (rare, e.g. odd spatial dims): pad the flat buffer up to an
    # aligned slab, run, slice the tail off. Zero padding is safe: h_swish(0)=0.
    lanes = 128
    rows = pl.cdiv(n, lanes)
    rows_padded = ((rows + s - 1) // s) * s
    padded = rows_padded * lanes
    x_flat = jnp.pad(jnp.ravel(x), (0, padded - n))
    out2d = _run_2d(x_flat.reshape(rows_padded, lanes))
    return out2d.reshape(-1)[:n].reshape(orig_shape)


def _h_swish_ref(x):
    return x * (jnp.clip(x + 3.0, 0.0, 6.0) / 6.0)


if __name__ == "__main__":
    key = jax.random.PRNGKey(0)
    k1, k2 = jax.random.split(key)

    # NCHW input, same axis convention as the PyTorch module (aligned fast path).
    x = jax.random.normal(k1, (2, 4, 16, 16), dtype=jnp.float32) * 4.0
    out = h_swish(x)
    jax.block_until_ready(out)
    ref = _h_swish_ref(x)
    assert out.shape == x.shape and out.dtype == x.dtype
    assert jnp.allclose(out, ref, atol=1e-5, rtol=1e-5)

    # Misaligned shape to exercise the padded fallback path.
    y = jax.random.normal(k2, (2, 3, 7, 5), dtype=jnp.float32) * 4.0
    out_y = h_swish(y)
    jax.block_until_ready(out_y)
    assert out_y.shape == y.shape and out_y.dtype == y.dtype
    assert jnp.allclose(out_y, _h_swish_ref(y), atol=1e-5, rtol=1e-5)

    print("KERNEL_OK")
</pallas_src>

<mosaic_0001>
module attributes {stable_mosaic.version = 11 : i64} {
  func.func @_h_swish_kernel(%arg0: i32, %arg1: memref<8x256xf32, #tpu.memory_space<vmem>>, %arg2: memref<8x256xf32, #tpu.memory_space<vmem>>) attributes {dimension_semantics = [#tpu.dimension_semantics<parallel>], iteration_bounds = array<i64: 1>, scalar_prefetch = 0 : i64, scratch_operands = 0 : i64, tpu.core_type = #tpu.core_type<tc>, window_params = [{transform_indices = @transform_0, window_bounds = array<i64: 8, 256>}, {transform_indices = @transform_1, window_bounds = array<i64: 8, 256>}]} {
    %c0 = arith.constant 0 : index
    %c0_0 = arith.constant 0 : index
    %0 = vector.load %arg1[%c0, %c0_0] : memref<8x256xf32, #tpu.memory_space<vmem>>, vector<8x256xf32>
    %cst = arith.constant 3.000000e+00 : f32
    %1 = vector.broadcast %cst : f32 to vector<8x256xf32>
    %2 = arith.addf %0, %1 : vector<8x256xf32>
    %cst_1 = arith.constant 0.000000e+00 : f32
    %cst_2 = arith.constant 6.000000e+00 : f32
    %3 = vector.broadcast %cst_1 : f32 to vector<8x256xf32>
    %4 = arith.maximumf %3, %2 : vector<8x256xf32>
    %5 = vector.broadcast %cst_2 : f32 to vector<8x256xf32>
    %6 = arith.minimumf %5, %4 : vector<8x256xf32>
    %cst_3 = arith.constant 0.166666672 : f32
    %7 = vector.broadcast %cst_3 : f32 to vector<8x256xf32>
    %8 = arith.mulf %6, %7 : vector<8x256xf32>
    %9 = arith.mulf %0, %8 : vector<8x256xf32>
    %c0_4 = arith.constant 0 : index
    %c0_5 = arith.constant 0 : index
    %10 = vector.load %arg2[%c0_4, %c0_5] : memref<8x256xf32, #tpu.memory_space<vmem>>, vector<8x256xf32>
    tpu.vector_store %arg2[%c0_4, %c0_5], %9 {strides = array<i32>} : memref<8x256xf32, #tpu.memory_space<vmem>>, vector<8x256xf32>,
    return
  }
  func.func @transform_0(%arg0: i32) -> (i32, i32) {
    %c0_i32 = arith.constant 0 : i32
    %c0_i32_0 = arith.constant 0 : i32
    return %arg0, %c0_i32 : i32, i32
  }
  func.func @transform_1(%arg0: i32) -> (i32, i32) {
    %c0_i32 = arith.constant 0 : i32
    %c0_i32_0 = arith.constant 0 : i32
    return %arg0, %c0_i32 : i32, i32
  }
}

</mosaic_0001>

<llo_original>
// kernel: tpu_custom_call.1
$region0: #{tpu_custom_call.1}
  #allocation0 [shape = 'u32[]', space=smem, size = 0x4, offset = 0x4, fixed_abs, tag = 'smem constant byte address 0x4 - core index']
  #allocation1 [shape = 'u32[144,128]{1,0:T(1,128)}', space=vmem, size = 0x12000, scoped, tag = 'internal scratch']
  %s0 = inlined_call_operand.hbm [shape: f32[8,256], index: 0, kind: input, shape index: {}]
  %s1 = inlined_call_operand.hbm [shape: f32[8,256], index: 1, kind: output, shape index: {}]
  %s2 = sld [smem:[#allocation0]]
  $region18: #{tpu_custom_call.1} parent=0
    _
  %s4 = ssub.s32 1, %s2
  %s5 = scalar_select 0, %s4, %s2
  $region1: #{tpu_custom_call.1} parent=0
    #allocation2 [shape = 'u8[8192]{0}', space=vmem, size = 0x2000, scoped, tag = 'input window, operand 0, single buffered']
    #allocation3 [shape = 's32[1]{0}', space=sflag, size = 0x4, scoped, tag = 'scoped memory for tpu_custom_call.1']
    #allocation4 [shape = 's32[1]{0}', space=sflag, size = 0x4, scoped, tag = 'scoped memory for tpu_custom_call.1']
    #allocation5 [shape = 'u8[8192]{0}', space=vmem, size = 0x2000, scoped, tag = 'output window, operand 0, single buffered']
    %6 = vsyncpa [#allocation3], 0
    %7 = vsyncpa [#allocation4], 0
    // Predicated region
    $region2: #{tpu_custom_call.1} parent=1 // pred_check
      _
    $region3: #{tpu_custom_call.1} parent=1 // pred_check_branch
      %9 = sbr.rel (0) target = $region5
    $region4: #{tpu_custom_call.1} parent=1 // pred_region
      %s11 = ssub.s32 256, 256
      %12 = vsyncadd [#allocation3], %s11
      %s14 = sshll.u32 [#allocation2], 4
      %s15 = int_to_ptr.vmem [resolvable:$true] %s14
      %17 = dma.hbm_to_vmem [thread:$0]  %s0, 256, %s15, [#allocation3]
    $region5: #{tpu_custom_call.1} parent=1 // pred_fallthru
      _
    // Predicated region
    $region6: #{tpu_custom_call.1} parent=1 // pred_check
      _
    $region7: #{tpu_custom_call.1} parent=1 // pred_check_branch
      %19 = sbr.rel (0) target = $region9
    $region8: #{tpu_custom_call.1} parent=1 // pred_region
      %20 = dma.done [#allocation3], 256
    $region9: #{tpu_custom_call.1} parent=1 // pred_fallthru
      _
    %v21 = vld [vmem:[#allocation2] sm:$0xff]
    %v22 = vld [vmem:[#allocation2 + $0x8] sm:$0xff]
    %v23 = vadd.f32 %v21, 3.0
    %v24 = vadd.f32 %v22, 3.0
    %v25 = vmax.f32 %v23, 0.0
    %v26 = vmax.f32 %v24, 0.0
    %v27 = vmin.f32 %v25, 6.0
    %v28 = vmin.f32 %v26, 6.0
    %v29 = vmul.f32 %v27, 0.16666667
    %v30 = vmul.f32 %v28, 0.16666667
    %v31 = vmul.f32 %v21, %v29
    %v32 = vmul.f32 %v22, %v30
    %33 = vst [vmem:[#allocation5] sm:$0xff] %v31
    %34 = vst [vmem:[#allocation5 + $0x8] sm:$0xff] %v32
    // Predicated region
    $region10: #{tpu_custom_call.1} parent=1 // pred_check
      _
    $region11: #{tpu_custom_call.1} parent=1 // pred_check_branch
      %36 = sbr.rel (0) target = $region13
    $region12: #{tpu_custom_call.1} parent=1 // pred_region
      %s38 = ssub.s32 256, 256
      %39 = vsyncadd [#allocation4], %s38
      %s41 = sshll.u32 [#allocation5], 4
      %s42 = int_to_ptr.vmem [resolvable:$true] %s41
      %44 = dma.vmem_to_hbm [thread:$0]  %s42, 256, %s1, [#allocation4]
    $region13: #{tpu_custom_call.1} parent=1 // pred_fallthru
      _
    // Predicated region
    $region14: #{tpu_custom_call.1} parent=1 // pred_check
      _
    $region15: #{tpu_custom_call.1} parent=1 // pred_check_branch
      %46 = sbr.rel (0) target = $region17
    $region16: #{tpu_custom_call.1} parent=1 // pred_region
      %47 = dma.done [#allocation4], 256
    $region17: #{tpu_custom_call.1} parent=1 // pred_fallthru
      _
    %48 = vsyncpa [#allocation3], 1
    %49 = vsyncpa [#allocation4], 1

</llo_original>
